<compile_context>
chip_gen: v7x
topology: tpu7x:2x2x1
jax: 0.10.0
libtpu: 0.0.40
codegen_flags: <defaults>
</compile_context>

<pallas_src>
import functools

import jax
import jax.numpy as jnp
from jax.experimental import pallas as pl
from jax.experimental.pallas import tpu as pltpu


def _round_up(v, m):
    return (v + m - 1) // m * m


def _device_kind():
    try:
        return jax.devices()[0].device_kind.lower()
    except Exception:
        return ""


def attention_gate_kernel(g_ref, x_ref, wgt_ref, wxt_ref, bsum_ref,
                          wp_ref, bp_ref, o_ref, *, use_mxu_psi):
    # Blocks: g_ref [1, F_g, tm], x_ref [1, F_l, tm] (pixels on the lane axis),
    # kept in their native activation dtype (bf16 in the demo).
    g_t = g_ref[0]                                    # [F_g, tm]
    x_t = x_ref[0]                                    # [F_l, tm]

    # Folded-BN 1x1 convs: contract over the (small) channel axis on the MXU.
    # Weights were pre-cast to the activation dtype, so bf16 x bf16 -> f32
    # accumulation happens natively (no VPU upcast pass over the tiles).
    a = jnp.dot(wgt_ref[...], g_t, preferred_element_type=jnp.float32)
    a = a + jnp.dot(wxt_ref[...], x_t, preferred_element_type=jnp.float32)
    a = jnp.maximum(a + bsum_ref[...], 0.0)           # [F_int, tm] f32

    bp = bp_ref[0]                                    # f32 scalar from SMEM
    if use_mxu_psi:
        # psi projection (F_int -> 1) on the otherwise-idle MXU.
        s = jnp.dot(wp_ref[...], a, preferred_element_type=jnp.float32) + bp
    else:
        # Tiny F_int: VPU multiply + sublane reduce beats an N=1 MXU matmul.
        s = jnp.sum(a * wp_ref[...], axis=0, keepdims=True) + bp      # [1, tm]
    psi = jax.nn.sigmoid(s)                           # [1, tm] f32

    # Gate: broadcast psi across channels; multiply in the activation dtype
    # (bf16 VALU on v6e/v7x).  NOTE: for a partial final pixel block the OOB
    # lanes carry garbage through exp/sigmoid — that is safe because Pallas
    # masks the OOB lanes on store; do not "fix" this with extra padding.
    o_ref[0] = (x_t * psi.astype(x_t.dtype)).astype(o_ref.dtype)


def fold_bn(w, b, gamma, beta, mean, var, eps=1e-5):
    """Fold eval-mode BatchNorm into a [Cin, Cout] matmul weight + bias."""
    scale = gamma / jnp.sqrt(var + eps)              # [Cout]
    w_eff = w * scale[None, :]                       # [Cin, Cout]
    b_eff = (b - mean) * scale + beta                # [Cout]
    return w_eff, b_eff


@functools.partial(jax.jit, static_argnames=("tm",))
def attention_gate(g, x, params, tm=None):
    """g: [N, F_g, H, W], x: [N, F_l, H, W] (NCHW).  Output: [N, F_l, H, W]."""
    N, F_g, H, W = g.shape
    _, F_l, _, _ = x.shape
    kind = _device_kind()
    if tm is None:
        # v7x: smaller pixel tiles (64 MiB VMEM / 2 TCs); v5e/v6e: 1024.
        tm = 512 if "7" in kind else 1024

    wg, bg = fold_bn(params["wg"], params["bg"], params["bn_g_gamma"],
                     params["bn_g_beta"], params["bn_g_mean"], params["bn_g_var"])
    wx, bx = fold_bn(params["wx"], params["bx"], params["bn_x_gamma"],
                     params["bn_x_beta"], params["bn_x_mean"], params["bn_x_var"])
    wp, bp = fold_bn(params["wp"], params["bp"], params["bn_p_gamma"],
                     params["bn_p_beta"], params["bn_p_mean"], params["bn_p_var"])
    F_int = wg.shape[1]

    # Transposed weights in the activation dtype (MXU takes bf16 directly);
    # branch biases folded into one f32 add.
    act_dtype = x.dtype
    wgt = wg.T.astype(act_dtype)                     # [F_int, F_g]
    wxt = wx.T.astype(act_dtype)                     # [F_int, F_l]
    b_sum = (bg + bx).reshape(F_int, 1)              # f32
    use_mxu_psi = F_int >= 32
    wp_arg = (wp.reshape(1, F_int) if use_mxu_psi else wp.reshape(F_int, 1))
    bp_arg = bp.reshape(1)                           # f32 scalar -> SMEM

    # NCHW -> [N, C, H*W]: pure reshape.  Pad pixels only to a lane multiple
    # (128) when needed — never to the tile size; the partial final tile is
    # handled (masked) by Pallas.
    M_pix = H * W
    Mp = _round_up(M_pix, 128)
    g3 = g.reshape(N, F_g, M_pix)
    x3 = x.reshape(N, F_l, M_pix)
    if Mp != M_pix:
        pad = ((0, 0), (0, 0), (0, Mp - M_pix))
        g3 = jnp.pad(g3, pad)
        x3 = jnp.pad(x3, pad)

    tm_eff = min(_round_up(tm, 128), Mp)
    if N == 1 and Mp > 128:
        # Guarantee >= 2 parallel grid steps so both v7x TensorCores get work.
        tm_eff = min(tm_eff, _round_up(pl.cdiv(Mp, 2), 128))
    grid = (N, pl.cdiv(Mp, tm_eff))

    # VMEM budget: sublane-rounded, double-buffered I/O tiles + f32
    # intermediates + double-buffered weights, capped below physical VMEM.
    act_bytes = jnp.dtype(act_dtype).itemsize

    def _sl(rows, itemsize):                         # sublane rounding
        return _round_up(rows, 8 * max(1, 4 // itemsize))

    def _ln(cols):                                   # lane rounding
        return _round_up(cols, 128)

    tile_bytes = (
        2 * _sl(F_g, act_bytes) * tm_eff * act_bytes                 # g tiles
        + 4 * _sl(F_l, act_bytes) * tm_eff * act_bytes               # x + out tiles
        + (_sl(F_int, 4) + 8) * tm_eff * 4                           # f32 a, psi
        + 2 * _sl(F_int, act_bytes) * (_ln(F_g) + _ln(F_l)) * act_bytes  # wgt, wxt
        + 4 * 8 * 128 * 4)                                           # small f32 blocks
    try:
        vmem_cap = int(pltpu.get_tpu_info().vmem_capacity_bytes)
    except Exception:
        vmem_cap = (64 if "7" in kind else 128) * 2 ** 20
    vmem_limit = int(min(int(0.75 * vmem_cap),
                         max(32 * 2 ** 20, tile_bytes + (2 << 20))))

    m_total = N * M_pix                              # exact, un-padded pixels
    w_bytes_total = (F_int * (F_g + F_l) * act_bytes + 4 * F_int * 2 + 8)
    cost = pl.CostEstimate(
        flops=2 * m_total * F_int * (F_g + F_l + 1) + 6 * m_total,
        transcendentals=m_total,
        bytes_accessed=m_total * (F_g + 2 * F_l) * act_bytes + w_bytes_total,
    )

    kernel = functools.partial(attention_gate_kernel, use_mxu_psi=use_mxu_psi)
    wp_spec = (pl.BlockSpec((1, F_int), lambda n, j: (0, 0)) if use_mxu_psi
               else pl.BlockSpec((F_int, 1), lambda n, j: (0, 0)))

    out3 = pl.pallas_call(
        kernel,
        out_shape=jax.ShapeDtypeStruct((N, F_l, Mp), x.dtype),
        grid_spec=pltpu.PrefetchScalarGridSpec(
            num_scalar_prefetch=0,
            grid=grid,
            in_specs=[
                pl.BlockSpec((1, F_g, tm_eff), lambda n, j: (n, 0, j)),   # g pixels
                pl.BlockSpec((1, F_l, tm_eff), lambda n, j: (n, 0, j)),   # x pixels
                pl.BlockSpec((F_int, F_g), lambda n, j: (0, 0)),          # W_g^T (BN folded)
                pl.BlockSpec((F_int, F_l), lambda n, j: (0, 0)),          # W_x^T (BN folded)
                pl.BlockSpec((F_int, 1), lambda n, j: (0, 0)),            # b_g + b_x
                wp_spec,                                                  # W_psi
                pl.BlockSpec(memory_space=pltpu.MemorySpace.SMEM),        # b_psi scalar
            ],
            out_specs=pl.BlockSpec((1, F_l, tm_eff), lambda n, j: (n, 0, j)),
        ),
        compiler_params=pltpu.CompilerParams(
            dimension_semantics=("parallel", "parallel"),
            vmem_limit_bytes=vmem_limit),
        cost_estimate=cost,
    )(g3, x3, wgt, wxt, b_sum, wp_arg, bp_arg)

    if Mp != M_pix:
        out3 = out3[:, :, :M_pix]
    return out3.reshape(N, F_l, H, W)


def make_params(key, F_g, F_l, F_int):
    ks = jax.random.split(key, 8)
    p = {
        # 1x1 conv weights stored as [Cin, Cout] matmul weights (f32).
        "wg": jax.random.normal(ks[0], (F_g, F_int), jnp.float32) * 0.1,
        "bg": jax.random.normal(ks[1], (F_int,), jnp.float32) * 0.1,
        "wx": jax.random.normal(ks[2], (F_l, F_int), jnp.float32) * 0.1,
        "bx": jax.random.normal(ks[3], (F_int,), jnp.float32) * 0.1,
        "wp": jax.random.normal(ks[4], (F_int, 1), jnp.float32) * 0.1,
        "bp": jax.random.normal(ks[5], (1,), jnp.float32) * 0.1,
        # BatchNorm params (non-trivial, deterministic) — eval mode.
        "bn_g_gamma": 1.0 + 0.05 * jnp.arange(F_int, dtype=jnp.float32),
        "bn_g_beta": 0.01 * jnp.arange(F_int, dtype=jnp.float32),
        "bn_g_mean": 0.02 * jnp.arange(F_int, dtype=jnp.float32),
        "bn_g_var": 1.0 + 0.1 * jnp.arange(F_int, dtype=jnp.float32),
        "bn_x_gamma": 1.0 - 0.03 * jnp.arange(F_int, dtype=jnp.float32),
        "bn_x_beta": -0.01 * jnp.arange(F_int, dtype=jnp.float32),
        "bn_x_mean": -0.02 * jnp.arange(F_int, dtype=jnp.float32),
        "bn_x_var": 1.0 + 0.05 * jnp.arange(F_int, dtype=jnp.float32),
        "bn_p_gamma": jnp.array([1.1], jnp.float32),
        "bn_p_beta": jnp.array([0.05], jnp.float32),
        "bn_p_mean": jnp.array([0.02], jnp.float32),
        "bn_p_var": jnp.array([1.2], jnp.float32),
    }
    return p


def reference(g, x, params):
    """Pure-JAX reference: same eval-mode folded-BN math, f32 compute."""
    wg, bg = fold_bn(params["wg"], params["bg"], params["bn_g_gamma"],
                     params["bn_g_beta"], params["bn_g_mean"], params["bn_g_var"])
    wx, bx = fold_bn(params["wx"], params["bx"], params["bn_x_gamma"],
                     params["bn_x_beta"], params["bn_x_mean"], params["bn_x_var"])
    wp, bp = fold_bn(params["wp"], params["bp"], params["bn_p_gamma"],
                     params["bn_p_beta"], params["bn_p_mean"], params["bn_p_var"])
    gn = jnp.transpose(g.astype(jnp.float32), (0, 2, 3, 1))
    xn = jnp.transpose(x.astype(jnp.float32), (0, 2, 3, 1))
    g1 = gn @ wg + bg
    x1 = xn @ wx + bx
    a = jnp.maximum(g1 + x1, 0.0)
    psi = jax.nn.sigmoid(a @ wp + bp)
    out = xn * psi
    return jnp.transpose(out, (0, 3, 1, 2)).astype(x.dtype)


if __name__ == "__main__":
    # Small shapes: batch=2, F_g=F_l=4 channels, 16x16 spatial, F_int=8.
    N, F_g, F_l, F_int, H, W = 2, 4, 4, 8, 16, 16
    key = jax.random.PRNGKey(0)
    kg, kx, kp = jax.random.split(key, 3)
    # bf16 activations (memory-bound op -> halves HBM bytes); BN-folded weights
    # are cast to bf16 in the wrapper, all accumulation stays f32.
    g = jax.random.normal(kg, (N, F_g, H, W), jnp.float32).astype(jnp.bfloat16)
    x = jax.random.normal(kx, (N, F_l, H, W), jnp.float32).astype(jnp.bfloat16)
    params = make_params(kp, F_g, F_l, F_int)

    out = jax.block_until_ready(attention_gate(g, x, params))
    ref = reference(g, x, params)

    assert out.shape == x.shape, (out.shape, x.shape)
    assert out.dtype == x.dtype, (out.dtype, x.dtype)
    # Kernel uses bf16 weights / bf16 gating multiply (f32 accumulation); allow
    # a few bf16 ulps vs the f32-weight reference.
    assert jnp.allclose(out.astype(jnp.float32), ref.astype(jnp.float32),
                        atol=2e-2, rtol=2e-2), "mismatch vs reference"
    print("KERNEL_OK")
</pallas_src>

<mosaic_0001>
module attributes {stable_mosaic.version = 11 : i64} {
  func.func @attention_gate_kernel(%arg0: i32, %arg1: i32, %arg2: memref<1x4x256xbf16, #tpu.memory_space<vmem>>, %arg3: memref<1x4x256xbf16, #tpu.memory_space<vmem>>, %arg4: memref<8x4xbf16, #tpu.memory_space<vmem>>, %arg5: memref<8x4xbf16, #tpu.memory_space<vmem>>, %arg6: memref<8x1xf32, #tpu.memory_space<vmem>>, %arg7: memref<8x1xf32, #tpu.memory_space<vmem>>, %arg8: memref<1xf32, #tpu.memory_space<smem>>, %arg9: memref<1x4x256xbf16, #tpu.memory_space<vmem>>) attributes {dimension_semantics = [#tpu.dimension_semantics<parallel>, #tpu.dimension_semantics<parallel>], iteration_bounds = array<i64: 2, 1>, scalar_prefetch = 0 : i64, scratch_operands = 0 : i64, tpu.core_type = #tpu.core_type<tc>, window_params = [{transform_indices = @transform_0, window_bounds = array<i64: 1, 4, 256>}, {transform_indices = @transform_1, window_bounds = array<i64: 1, 4, 256>}, {pipeline_mode = #tpu.pipeline_mode<synchronous>, transform_indices = @transform_2, window_bounds = array<i64: 8, 4>}, {pipeline_mode = #tpu.pipeline_mode<synchronous>, transform_indices = @transform_3, window_bounds = array<i64: 8, 4>}, {pipeline_mode = #tpu.pipeline_mode<synchronous>, transform_indices = @transform_4, window_bounds = array<i64: 8, 1>}, {pipeline_mode = #tpu.pipeline_mode<synchronous>, transform_indices = @transform_5, window_bounds = array<i64: 8, 1>}, {transform_indices = @transform_6, window_bounds = array<i64: 1>}, {transform_indices = @transform_7, window_bounds = array<i64: 1, 4, 256>}]} {
    %c0 = arith.constant 0 : index
    %c0_0 = arith.constant 0 : index
    %c0_1 = arith.constant 0 : index
    %0 = vector.load %arg2[%c0, %c0_0, %c0_1] : memref<1x4x256xbf16, #tpu.memory_space<vmem>>, vector<1x4x256xbf16>
    %1 = vector.shape_cast %0 : vector<1x4x256xbf16> to vector<4x256xbf16>
    %c0_2 = arith.constant 0 : index
    %c0_3 = arith.constant 0 : index
    %c0_4 = arith.constant 0 : index
    %2 = vector.load %arg3[%c0_2, %c0_3, %c0_4] : memref<1x4x256xbf16, #tpu.memory_space<vmem>>, vector<1x4x256xbf16>
    %3 = vector.shape_cast %2 : vector<1x4x256xbf16> to vector<4x256xbf16>
    %c0_5 = arith.constant 0 : index
    %c0_6 = arith.constant 0 : index
    %4 = vector.load %arg4[%c0_5, %c0_6] : memref<8x4xbf16, #tpu.memory_space<vmem>>, vector<8x4xbf16>
    %cst = arith.constant dense<0.000000e+00> : vector<8x256xf32>
    %5 = tpu.matmul %4, %1, %cst {dimension_numbers = #tpu.dot_dimension_numbers<[1], [0], [0], [1], [0, 0, 1, 1], [], []>} : vector<8x4xbf16>, vector<4x256xbf16>, vector<8x256xf32> -> vector<8x256xf32>
    %c0_7 = arith.constant 0 : index
    %c0_8 = arith.constant 0 : index
    %6 = vector.load %arg5[%c0_7, %c0_8] : memref<8x4xbf16, #tpu.memory_space<vmem>>, vector<8x4xbf16>
    %cst_9 = arith.constant dense<0.000000e+00> : vector<8x256xf32>
    %7 = tpu.matmul %6, %3, %cst_9 {dimension_numbers = #tpu.dot_dimension_numbers<[1], [0], [0], [1], [0, 0, 1, 1], [], []>} : vector<8x4xbf16>, vector<4x256xbf16>, vector<8x256xf32> -> vector<8x256xf32>
    %8 = arith.addf %5, %7 : vector<8x256xf32>
    %c0_10 = arith.constant 0 : index
    %c0_11 = arith.constant 0 : index
    %9 = vector.load %arg6[%c0_10, %c0_11] : memref<8x1xf32, #tpu.memory_space<vmem>>, vector<8x1xf32>
    %10 = vector.broadcast %9 : vector<8x1xf32> to vector<8x256xf32>
    %11 = arith.addf %8, %10 : vector<8x256xf32>
    %cst_12 = arith.constant 0.000000e+00 : f32
    %12 = vector.broadcast %cst_12 : f32 to vector<8x256xf32>
    %13 = arith.maximumf %11, %12 : vector<8x256xf32>
    %c0_13 = arith.constant 0 : index
    %14 = memref.load %arg8[%c0_13] : memref<1xf32, #tpu.memory_space<smem>>
    %c0_14 = arith.constant 0 : index
    %c0_15 = arith.constant 0 : index
    %15 = vector.load %arg7[%c0_14, %c0_15] : memref<8x1xf32, #tpu.memory_space<vmem>>, vector<8x1xf32>
    %16 = vector.broadcast %15 : vector<8x1xf32> to vector<8x256xf32>
    %17 = arith.mulf %13, %16 : vector<8x256xf32>
    %cst_16 = arith.constant dense<0.000000e+00> : vector<256xf32>
    %18 = vector.multi_reduction <add>, %17, %cst_16 [0] : vector<8x256xf32> to vector<256xf32>
    %19 = vector.shape_cast %18 : vector<256xf32> to vector<1x256xf32>
    %20 = vector.broadcast %14 : f32 to vector<1x256xf32>
    %21 = arith.addf %19, %20 : vector<1x256xf32>
    %22 = arith.negf %21 : vector<1x256xf32>
    %23 = math.exp %22 : vector<1x256xf32>
    %cst_17 = arith.constant 1.000000e+00 : f32
    %24 = vector.broadcast %cst_17 : f32 to vector<1x256xf32>
    %25 = arith.addf %24, %23 : vector<1x256xf32>
    %26 = arith.divf %24, %25 : vector<1x256xf32>
    %27 = arith.truncf %26 : vector<1x256xf32> to vector<1x256xbf16>
    %28 = vector.broadcast %27 : vector<1x256xbf16> to vector<4x256xbf16>
    %29 = arith.mulf %3, %28 : vector<4x256xbf16>
    %c0_18 = arith.constant 0 : index
    %c0_19 = arith.constant 0 : index
    %c0_20 = arith.constant 0 : index
    %30 = vector.load %arg9[%c0_18, %c0_19, %c0_20] : memref<1x4x256xbf16, #tpu.memory_space<vmem>>, vector<1x4x256xbf16>
    %31 = vector.shape_cast %30 : vector<1x4x256xbf16> to vector<4x256xbf16>
    %32 = vector.shape_cast %29 : vector<4x256xbf16> to vector<1x4x256xbf16>
    tpu.vector_store %arg9[%c0_18, %c0_19, %c0_20], %32 {strides = array<i32>} : memref<1x4x256xbf16, #tpu.memory_space<vmem>>, vector<1x4x256xbf16>,
    return
  }
  func.func @transform_0(%arg0: i32, %arg1: i32) -> (i32, i32, i32) {
    %c0_i32 = arith.constant 0 : i32
    %c0_i32_0 = arith.constant 0 : i32
    return %arg0, %c0_i32, %arg1 : i32, i32, i32
  }
  func.func @transform_1(%arg0: i32, %arg1: i32) -> (i32, i32, i32) {
    %c0_i32 = arith.constant 0 : i32
    %c0_i32_0 = arith.constant 0 : i32
    return %arg0, %c0_i32, %arg1 : i32, i32, i32
  }
  func.func @transform_2(%arg0: i32, %arg1: i32) -> (i32, i32) {
    %c0_i32 = arith.constant 0 : i32
    %c0_i32_0 = arith.constant 0 : i32
    %c0_i32_1 = arith.constant 0 : i32
    return %c0_i32, %c0_i32_0 : i32, i32
  }
  func.func @transform_3(%arg0: i32, %arg1: i32) -> (i32, i32) {
    %c0_i32 = arith.constant 0 : i32
    %c0_i32_0 = arith.constant 0 : i32
    %c0_i32_1 = arith.constant 0 : i32
    return %c0_i32, %c0_i32_0 : i32, i32
  }
  func.func @transform_4(%arg0: i32, %arg1: i32) -> (i32, i32) {
    %c0_i32 = arith.constant 0 : i32
    %c0_i32_0 = arith.constant 0 : i32
    %c0_i32_1 = arith.constant 0 : i32
    return %c0_i32, %c0_i32_0 : i32, i32
  }
  func.func @transform_5(%arg0: i32, %arg1: i32) -> (i32, i32) {
    %c0_i32 = arith.constant 0 : i32
    %c0_i32_0 = arith.constant 0 : i32
    %c0_i32_1 = arith.constant 0 : i32
    return %c0_i32, %c0_i32_0 : i32, i32
  }
  func.func @transform_6(%arg0: i32, %arg1: i32) -> i32 {
    %c0_i32 = arith.constant 0 : i32
    %c0_i32_0 = arith.constant 0 : i32
    return %c0_i32 : i32
  }
  func.func @transform_7(%arg0: i32, %arg1: i32) -> (i32, i32, i32) {
    %c0_i32 = arith.constant 0 : i32
    %c0_i32_0 = arith.constant 0 : i32
    return %arg0, %c0_i32, %arg1 : i32, i32, i32
  }
}

</mosaic_0001>

<llo_original>
// kernel: attention_gate.1
$region0: #{attention_gate.1}
  #allocation0 [shape = 'u32[]', space=smem, size = 0x4, offset = 0x4, fixed_abs, tag = 'smem constant byte address 0x4 - core index']
  #allocation1 [shape = 'u32[144,128]{1,0:T(1,128)}', space=vmem, size = 0x12000, scoped, tag = 'internal scratch']
  #allocation2 [shape = 'f32[1]{0:T(128)S(6)}', space=smem, size = 0x200, scoped, tag = 'scoped memory for attention_gate.1']
  %s0 = inlined_call_operand.vmem [shape: bf16[2,4,256], index: 0, kind: input, shape index: {}]
  %s1 = inlined_call_operand.vmem [shape: bf16[2,4,256], index: 1, kind: input, shape index: {}]
  %s2 = inlined_call_operand.vmem [shape: bf16[8,4], index: 2, kind: input, shape index: {}]
  %s3 = inlined_call_operand.vmem [shape: bf16[8,4], index: 3, kind: input, shape index: {}]
  %s4 = inlined_call_operand.vmem [shape: f32[8,1], index: 4, kind: input, shape index: {}]
  %s5 = inlined_call_operand.vmem [shape: f32[8,1], index: 5, kind: input, shape index: {}]
  %s6 = inlined_call_operand.<no memory space> [shape: f32[1], index: 6, kind: input, shape index: {}]
  %s7 = inlined_call_operand.vmem [shape: bf16[2,4,256], index: 7, kind: output, shape index: {}]
  %s8 = sld [smem:[#allocation0]]
  $region61: #{attention_gate.1} parent=0
    _
  %s10 = ssub.s32 1, %s8
  %s11 = scalar_select 0, %s10, %s8
  %12 = sst [smem:[#allocation2]] %s6
  loop: start=0, step=1, limit=4
  $region2: #{attention_gate.1} parent=0 // loop_pre_header
    _
  $region3: #{attention_gate.1} parent=0 // loop_header
    %s14 = sphi 0, %s18
    %p15 = scmp.ge.s32.totalorder %s14, 4
    %s21 = sphi 0, %s33
    %s22 = sphi 0, %s29
    %s23 = sphi 0, %s21
    %s24 = sphi 0, %s22
    %s25 = sphi 0, %s23
    %s26 = sphi 0, %s24
    %s38 = sphi 0, %s40
    %s41 = sphi 0, %s38
    %s42 = sphi 0, %s41
    %s58 = sphi 0, %s42
    %s66 = sphi 0, %s68
    %s69 = sphi 0, %s66
    %s70 = sphi 0, %s69
    %s86 = sphi 0, %s70
    %s90 = sphi 0, %s90
    %s92 = sphi 0, %s90
    %s93 = sphi 0, %s92
    %s107 = sphi 0, %s93
    %s111 = sphi 0, %s111
    %s113 = sphi 0, %s111
    %s114 = sphi 0, %s113
    %s128 = sphi 0, %s114
    %s132 = sphi 0, %s132
    %s134 = sphi 0, %s132
    %s135 = sphi 0, %s134
    %s149 = sphi 0, %s135
    %s153 = sphi 0, %s153
    %s155 = sphi 0, %s153
    %s156 = sphi 0, %s155
    %s170 = sphi 0, %s156
    %s174 = sphi 0, %s174
    %s176 = sphi 0, %s174
    %s177 = sphi 0, %s176
    %s191 = sphi 0, %s177
    %s199 = sphi 0, %s201
    %s202 = sphi 0, %s199
    %s203 = sphi 0, %s202
    %s219 = sphi 0, %s203
  $region4: #{attention_gate.1} parent=0 // loop_header_branch
    %17 = sbr.rel (%p15) target = $region8
  $region5: #{attention_gate.1} parent=0 // loop_body
    %s19 = ssub.s32 %s14, 1
    %s20 = ssub.s32 %s14, 2
    %s27 = sadd.s32 1, %s22
    %p28 = scmp.ge.s32.totalorder %s27, 1
    %s29 = scalar_select %p28, 0, %s27
    %s30 = sadd.s32 1, %s21
    %s31 = scalar_select %p28, %s30, %s21
    %p32 = scmp.ge.s32.totalorder %s31, 2
    %s33 = scalar_select %p32, 0, %s31
    %s34 = ssub.s32 %s21, %s33
    %s35 = ssub.s32 %s22, %s29
    %s36 = sor.u32 %s34, %s35
    %p37 = scmp.eq.s32.totalorder %s36, 0
    %s39 = sadd.s32 %s38, 1
    %s40 = scalar_select %p37, %s38, %s39
    %p43 = pneg %p37
    %p44 = scmp.eq.s32.totalorder %s14, 1
    %p45 = por %p43, %p44
    %p46 = scmp.ne.s32.totalorder %s38, %s41
    %p47 = scmp.eq.s32.totalorder %s14, 0
    %p48 = por %p46, %p47
    %p49 = scmp.ne.s32.totalorder %s38, %s41
    %p50 = scmp.eq.s32.totalorder %s19, 1
    %p51 = por %p49, %p50
    %p52 = scmp.ne.s32.totalorder %s41, %s42
    %p53 = scmp.eq.s32.totalorder %s19, 0
    %p54 = por %p52, %p53
    %p55 = scmp.ne.s32.totalorder %s41, %s42
    %p56 = scmp.eq.s32.totalorder %s20, 1
    %p57 = por %p55, %p56
    %p59 = scmp.ne.s32.totalorder %s42, %s58
    %p60 = scmp.eq.s32.totalorder %s20, 0
    %p61 = por %p59, %p60
    %s62 = ssub.s32 %s21, %s33
    %s63 = ssub.s32 %s22, %s29
    %s64 = sor.u32 %s62, %s63
    %p65 = scmp.eq.s32.totalorder %s64, 0
    %s67 = sadd.s32 %s66, 1
    %s68 = scalar_select %p65, %s66, %s67
    %p71 = pneg %p65
    %p72 = scmp.eq.s32.totalorder %s14, 1
    %p73 = por %p71, %p72
    %p74 = scmp.ne.s32.totalorder %s66, %s69
    %p75 = scmp.eq.s32.totalorder %s14, 0
    %p76 = por %p74, %p75
    %p77 = scmp.ne.s32.totalorder %s66, %s69
    %p78 = scmp.eq.s32.totalorder %s19, 1
    %p79 = por %p77, %p78
    %p80 = scmp.ne.s32.totalorder %s69, %s70
    %p81 = scmp.eq.s32.totalorder %s19, 0
    %p82 = por %p80, %p81
    %p83 = scmp.ne.s32.totalorder %s69, %s70
    %p84 = scmp.eq.s32.totalorder %s20, 1
    %p85 = por %p83, %p84
    %p87 = scmp.ne.s32.totalorder %s70, %s86
    %p88 = scmp.eq.s32.totalorder %s20, 0
    %p89 = por %p87, %p88
    %s91 = sadd.s32 %s90, 1
    %p94 = scmp.eq.s32.totalorder %s14, 1
    %p95 = scmp.ne.s32.totalorder %s90, %s92
    %p96 = scmp.eq.s32.totalorder %s14, 0
    %p97 = por %p95, %p96
    %p98 = scmp.ne.s32.totalorder %s90, %s92
    %p99 = scmp.eq.s32.totalorder %s19, 1
    %p100 = por %p98, %p99
    %p101 = scmp.ne.s32.totalorder %s92, %s93
    %p102 = scmp.eq.s32.totalorder %s19, 0
    %p103 = por %p101, %p102
    %p104 = scmp.ne.s32.totalorder %s92, %s93
    %p105 = scmp.eq.s32.totalorder %s20, 1
    %p106 = por %p104, %p105
    %p108 = scmp.ne.s32.totalorder %s93, %s107
    %p109 = scmp.eq.s32.totalorder %s20, 0
    %p110 = por %p108, %p109
    %s112 = sadd.s32 %s111, 1
    %p115 = scmp.eq.s32.totalorder %s14, 1
    %p116 = scmp.ne.s32.totalorder %s111, %s113
    %p117 = scmp.eq.s32.totalorder %s14, 0
    %p118 = por %p116, %p117
    %p119 = scmp.ne.s32.totalorder %s111, %s113
    %p120 = scmp.eq.s32.totalorder %s19, 1
    %p121 = por %p119, %p120
    %p122 = scmp.ne.s32.totalorder %s113, %s114
    %p123 = scmp.eq.s32.totalorder %s19, 0
    %p124 = por %p122, %p123
    %p125 = scmp.ne.s32.totalorder %s113, %s114
    %p126 = scmp.eq.s32.totalorder %s20, 1
    %p127 = por %p125, %p126
    %p129 = scmp.ne.s32.totalorder %s114, %s128
    %p130 = scmp.eq.s32.totalorder %s20, 0
    %p131 = por %p129, %p130
    %s133 = sadd.s32 %s132, 1
    %p136 = scmp.eq.s32.totalorder %s14, 1
    %p137 = scmp.ne.s32.totalorder %s132, %s134
    %p138 = scmp.eq.s32.totalorder %s14, 0
    %p139 = por %p137, %p138
    %p140 = scmp.ne.s32.totalorder %s132, %s134
    %p141 = scmp.eq.s32.totalorder %s19, 1
    %p142 = por %p140, %p141
    %p143 = scmp.ne.s32.totalorder %s134, %s135
    %p144 = scmp.eq.s32.totalorder %s19, 0
    %p145 = por %p143, %p144
    %p146 = scmp.ne.s32.totalorder %s134, %s135
    %p147 = scmp.eq.s32.totalorder %s20, 1
    %p148 = por %p146, %p147
    %p150 = scmp.ne.s32.totalorder %s135, %s149
    %p151 = scmp.eq.s32.totalorder %s20, 0
    %p152 = por %p150, %p151
    %s154 = sadd.s32 %s153, 1
    %p157 = scmp.eq.s32.totalorder %s14, 1
    %p158 = scmp.ne.s32.totalorder %s153, %s155
    %p159 = scmp.eq.s32.totalorder %s14, 0
    %p160 = por %p158, %p159
    %p161 = scmp.ne.s32.totalorder %s153, %s155
    %p162 = scmp.eq.s32.totalorder %s19, 1
    %p163 = por %p161, %p162
    %p164 = scmp.ne.s32.totalorder %s155, %s156
    %p165 = scmp.eq.s32.totalorder %s19, 0
    %p166 = por %p164, %p165
    %p167 = scmp.ne.s32.totalorder %s155, %s156
    %p168 = scmp.eq.s32.totalorder %s20, 1
    %p169 = por %p167, %p168
    %p171 = scmp.ne.s32.totalorder %s156, %s170
    %p172 = scmp.eq.s32.totalorder %s20, 0
    %p173 = por %p171, %p172
    %s175 = sadd.s32 %s174, 1
    %p178 = scmp.eq.s32.totalorder %s14, 1
    %p179 = scmp.ne.s32.totalorder %s174, %s176
    %p180 = scmp.eq.s32.totalorder %s14, 0
    %p181 = por %p179, %p180
    %p182 = scmp.ne.s32.totalorder %s174, %s176
    %p183 = scmp.eq.s32.totalorder %s19, 1
    %p184 = por %p182, %p183
    %p185 = scmp.ne.s32.totalorder %s176, %s177
    %p186 = scmp.eq.s32.totalorder %s19, 0
    %p187 = por %p185, %p186
    %p188 = scmp.ne.s32.totalorder %s176, %s177
    %p189 = scmp.eq.s32.totalorder %s20, 1
    %p190 = por %p188, %p189
    %p192 = scmp.ne.s32.totalorder %s177, %s191
    %p193 = scmp.eq.s32.totalorder %s20, 0
    %p194 = por %p192, %p193
    %s195 = ssub.s32 %s21, %s33
    %s196 = ssub.s32 %s22, %s29
    %s197 = sor.u32 %s195, %s196
    %p198 = scmp.eq.s32.totalorder %s197, 0
    %s200 = sadd.s32 %s199, 1
    %s201 = scalar_select %p198, %s199, %s200
    %p204 = pneg %p198
    %p205 = scmp.eq.s32.totalorder %s14, 1
    %p206 = por %p204, %p205
    %p207 = scmp.ne.s32.totalorder %s199, %s202
    %p208 = scmp.eq.s32.totalorder %s14, 0
    %p209 = por %p207, %p208
    %p210 = scmp.ne.s32.totalorder %s199, %s202
    %p211 = scmp.eq.s32.totalorder %s19, 1
    %p212 = por %p210, %p211
    %p213 = scmp.ne.s32.totalorder %s202, %s203
    %p214 = scmp.eq.s32.totalorder %s19, 0
    %p215 = por %p213, %p214
    %p216 = scmp.ne.s32.totalorder %s202, %s203
    %p217 = scmp.eq.s32.totalorder %s20, 1
    %p218 = por %p216, %p217
    %p220 = scmp.ne.s32.totalorder %s203, %s219
    %p221 = scmp.eq.s32.totalorder %s20, 0
    %p222 = por %p220, %p221
    %p223 = scmp.le.s32.totalorder 1, %s14
    %p224 = scmp.lt.s32.totalorder %s14, 3
    %p225 = pnand %p223, %p224
    %p226 = pneg %p225
    // Predicated region
    $region9: #{attention_gate.1} parent=5 // pred_check
      _
    $region10: #{attention_gate.1} parent=5 // pred_check_branch
      %228 = sbr.rel (%p225) target = $region12
    $region11: #{attention_gate.1} parent=5 // pred_region
      %s229 = ssub.s32 %s14, 1
      // Predicated region
      $region13: #{attention_gate.1} parent=11 // pred_check
        %p230 = pneg %p103
      $region14: #{attention_gate.1} parent=11 // pred_check_branch
        %232 = sbr.rel (%p230) target = $region16
      $region15: #{attention_gate.1} parent=11 // pred_region
        _
      $region16: #{attention_gate.1} parent=11 // pred_fallthru
        _
      // Predicated region
      $region17: #{attention_gate.1} parent=11 // pred_check
        %p233 = pneg %p124
      $region18: #{attention_gate.1} parent=11 // pred_check_branch
        %235 = sbr.rel (%p233) target = $region20
      $region19: #{attention_gate.1} parent=11 // pred_region
        _
      $region20: #{attention_gate.1} parent=11 // pred_fallthru
        _
      // Predicated region
      $region21: #{attention_gate.1} parent=11 // pred_check
        %p236 = pneg %p145
      $region22: #{attention_gate.1} parent=11 // pred_check_branch
        %238 = sbr.rel (%p236) target = $region24
      $region23: #{attention_gate.1} parent=11 // pred_region
        _
      $region24: #{attention_gate.1} parent=11 // pred_fallthru
        _
      // Predicated region
      $region25: #{attention_gate.1} parent=11 // pred_check
        %p239 = pneg %p166
      $region26: #{attention_gate.1} parent=11 // pred_check_branch
        %241 = sbr.rel (%p239) target = $region28
      $region27: #{attention_gate.1} parent=11 // pred_region
        _
      $region28: #{attention_gate.1} parent=11 // pred_fallthru
        _
      // Predicated region
      $region29: #{attention_gate.1} parent=11 // pred_check
        %p242 = pneg %p187
      $region30: #{attention_gate.1} parent=11 // pred_check_branch
        %244 = sbr.rel (%p242) target = $region32
      $region31: #{attention_gate.1} parent=11 // pred_region
        _
      $region32: #{attention_gate.1} parent=11 // pred_fallthru
        _
    $region12: #{attention_gate.1} parent=5 // pred_fallthru
      _
    %p245 = scmp.lt.s32.totalorder %s14, 2
    // Predicated region
    $region33: #{attention_gate.1} parent=5 // pred_check
      %p246 = pneg %p245
    $region34: #{attention_gate.1} parent=5 // pred_check_branch
      %248 = sbr.rel (%p246) target = $region36
    $region35: #{attention_gate.1} parent=5 // pred_region
      // Predicated region
      $region37: #{attention_gate.1} parent=35 // pred_check
        %p249 = pneg %p48
      $region38: #{attention_gate.1} parent=35 // pred_check_branch
        %251 = sbr.rel (%p249) target = $region40
      $region39: #{attention_gate.1} parent=35 // pred_region
        %s252 = smul.u32 2, %s22
        %p253 = scmp.lt.s32.totalorder %s21, 1
        %s254 = scalar_select %p253, %s21, 1
        %p255 = scmp.lt.s32.totalorder %s252, 1
        %s256 = scalar_select %p255, %s252, 1
        %s257 = smul.addr %s254, 2
        %s258 = sadd.s32 %s256, %s257
        %s259 = smul.addr %s258, 2
        %s260 = scalar_lea.vmem %s0, %s259
        %s261 = smul.u32 2, %s22
      $region40: #{attention_gate.1} parent=35 // pred_fallthru
        _
      // Predicated region
      $region41: #{attention_gate.1} parent=35 // pred_check
        %p262 = pneg %p76
      $region42: #{attention_gate.1} parent=35 // pred_check_branch
        %264 = sbr.rel (%p262) target = $region44
      $region43: #{attention_gate.1} parent=35 // pred_region
        %s265 = smul.u32 2, %s22
        %p266 = scmp.lt.s32.totalorder %s21, 1
        %s267 = scalar_select %p266, %s21, 1
        %p268 = scmp.lt.s32.totalorder %s265, 1
        %s269 = scalar_select %p268, %s265, 1
        %s270 = smul.addr %s267, 2
        %s271 = sadd.s32 %s269, %s270
        %s272 = smul.addr %s271, 2
        %s273 = scalar_lea.vmem %s1, %s272
        %s274 = smul.u32 2, %s22
      $region44: #{attention_gate.1} parent=35 // pred_fallthru
        _
    $region36: #{attention_gate.1} parent=5 // pred_fallthru
      _
    %p275 = scmp.le.s32.totalorder 1, %s14
    %p276 = scmp.lt.s32.totalorder %s14, 3
    %p277 = pnand %p275, %p276
    %p278 = pneg %p277
    // Predicated region
    $region45: #{attention_gate.1} parent=5 // pred_check
      _
    $region46: #{attention_gate.1} parent=5 // pred_check_branch
      %280 = sbr.rel (%p277) target = $region48
    $region47: #{attention_gate.1} parent=5 // pred_region
      %s281 = ssub.s32 %s14, 1
      %s282 = smul.u32 2, %s24
      %p283 = scmp.lt.s32.totalorder %s23, 1
      %s284 = scalar_select %p283, %s23, 1
      %p285 = scmp.lt.s32.totalorder %s282, 1
      %s286 = scalar_select %p285, %s282, 1
      %s287 = smul.addr %s284, 2
      %s288 = sadd.s32 %s286, %s287
      %s289 = smul.addr %s288, 2
      %s290 = scalar_lea.vmem %s0, %s289
      %p291 = pneg %p54
      %p292 = pneg %p51
      %s293 = smul.u32 2, %s24
      %p294 = scmp.lt.s32.totalorder %s23, 1
      %s295 = scalar_select %p294, %s23, 1
      %p296 = scmp.lt.s32.totalorder %s293, 1
      %s297 = scalar_select %p296, %s293, 1
      %s298 = smul.addr %s295, 2
      %s299 = sadd.s32 %s297, %s298
      %s300 = smul.addr %s299, 2
      %s301 = scalar_lea.vmem %s1, %s300
      %p302 = pneg %p82
      %p303 = pneg %p79
      %p304 = pneg %p103
      %p305 = pneg %p100
      %p306 = pneg %p124
      %p307 = pneg %p121
      %p308 = pneg %p145
      %p309 = pneg %p142
      %p310 = pneg %p166
      %p311 = pneg %p163
      %p312 = pneg %p187
      %p313 = pneg %p184
      %p314 = pneg %p215
      %p315 = pneg %p212
      %s316 = smul.u32 2, %s24
      %p317 = scmp.lt.s32.totalorder %s23, 1
      %s318 = scalar_select %p317, %s23, 1
      %p319 = scmp.lt.s32.totalorder %s316, 1
      %s320 = scalar_select %p319, %s316, 1
      %s321 = smul.addr %s318, 2
      %s322 = sadd.s32 %s320, %s321
      %s323 = smul.addr %s322, 2
      %s324 = scalar_lea.vmem %s7, %s323
      %s325 = smul.u32 2, %s24
      %p326 = scmp.lt.s32.totalorder %s23, 1
      %s327 = scalar_select %p326, %s23, 1
      %p328 = scmp.lt.s32.totalorder %s325, 1
      %s329 = scalar_select %p328, %s325, 1
      %s330 = smul.addr %s327, 2
      %s331 = sadd.s32 %s329, %s330
      %s332 = smul.addr %s331, 2
      %s333 = scalar_lea.vmem %s0, %s332
      %s334 = smul.u32 2, %s24
      %s335 = smul.u32 2, %s24
      %p336 = scmp.lt.s32.totalorder %s23, 1
      %s337 = scalar_select %p336, %s23, 1
      %p338 = scmp.lt.s32.totalorder %s335, 1
      %s339 = scalar_select %p338, %s335, 1
      %s340 = smul.addr %s337, 2
      %s341 = sadd.s32 %s339, %s340
      %s342 = smul.addr %s341, 2
      %s343 = scalar_lea.vmem %s1, %s342
      %s344 = smul.u32 2, %s24
      %s345 = smul.u32 2, %s24
      %p346 = scmp.lt.s32.totalorder %s23, 1
      %s347 = scalar_select %p346, %s23, 1
      %p348 = scmp.lt.s32.totalorder %s345, 1
      %s349 = scalar_select %p348, %s345, 1
      %s350 = smul.addr %s347, 2
      %s351 = sadd.s32 %s349, %s350
      %s352 = smul.addr %s351, 2
      %s353 = scalar_lea.vmem %s7, %s352
      %s354 = smul.u32 2, %s24
      %v356 = vld [vmem:[%s333] sm:$0xf]
      %v357 = vld [vmem:[%s343] sm:$0xf]
      %v358 = vld [vmem:[%s2] sm:$0xf]
      %v359 = vld [vmem:[%s3] sm:$0xf]
      %v362 = vunpack.c.l.s4 1983009808
      %v363 = vunpack.c.0.s8 %v362
      %v364 = vlaneseq
      %v365 = vshrl.u32 %v364, 7
      %v366 = vsub.s32 %v363, %v365
      %v367 = vrot.slane %v357, %v366
      %v368 = vcombine.high %v367, %v367
      %vm369 = vcmask 31744
      %v371 = vsel %vm369, %v359, 0
      %vm373 = vcmask 1041408
      %v375 = vsel %vm373, %v367, 0
      %v378 = vsel %vm373, %v368, 0
      %380 = vmatprep.subr.bf16.mxu0 %v378
      %381 = vmatpush1.bf16.msra.mxu0 %v375
      %382 = vmatprep.subr.bf16.mxu0 0
      %383 = vmatpush1.bf16.msra.mxu0 0
      %384 = vmatprep.subr.bf16.mxu0 0
      %385 = vmatpush1.bf16.msra.mxu0 0
      %386 = vmatprep.subr.bf16.mxu0 0
      %387 = vmatpush1.bf16.msra.mxu0 0
      %388 = vmatprep.subr.bf16.mxu0 0
      %389 = vmatpush1.bf16.msra.mxu0 0
      %390 = vmatprep.subr.bf16.mxu0 0
      %391 = vmatpush1.bf16.msra.mxu0 0
      %392 = vmatprep.subr.bf16.mxu0 0
      %393 = vmatpush1.bf16.msra.mxu0 0
      %394 = vmatprep.subr.bf16.mxu0 0
      %395 = vmatpush1.bf16.msra.mxu0 0
      %396 = vmatprep.subr.bf16.mxu0 0
      %397 = vmatpush1.bf16.msra.mxu0 0
      %398 = vmatprep.subr.bf16.mxu0 0
      %399 = vmatpush1.bf16.msra.mxu0 0
      %400 = vmatprep.subr.bf16.mxu0 0
      %401 = vmatpush1.bf16.msra.mxu0 0
      %402 = vmatprep.subr.bf16.mxu0 0
      %403 = vmatpush1.bf16.msra.mxu0 0
      %404 = vmatprep.subr.bf16.mxu0 0
      %405 = vmatpush1.bf16.msra.mxu0 0
      %406 = vmatprep.subr.bf16.mxu0 0
      %407 = vmatpush1.bf16.msra.mxu0 0
      %408 = vmatprep.subr.bf16.mxu0 0
      %409 = vmatpush1.bf16.msra.mxu0 0
      %410 = vmatprep.subr.bf16.mxu0 0
      %411 = vmatpush1.bf16.msra.mxu0 0
      %412 = vmatprep.mubr.bf16.mxu0 0
      %413 = vmatmul.mubr.bf16.gmra.mrb[0].mxu0 %v371
      %v414 = vpop.f32.mrb[0].mxu0
      %v415 = vadd.f32 0.0, %v414
      %v416 = vpop.f32.mrb[0].mxu0
      %v417 = vadd.f32 0.0, %v416
      %v418 = vpop.f32.mrb[0].mxu0
      %v419 = vpop.f32.mrb[0].mxu0
      %420 = vdwg.mxu0
      %v423 = vunpack.c.l.s4 1983009808
      %v424 = vunpack.c.0.s8 %v423
      %v425 = vlaneseq
      %v426 = vshrl.u32 %v425, 7
      %v427 = vsub.s32 %v424, %v426
      %v428 = vrot.slane %v356, %v427
      %v429 = vcombine.high %v428, %v428
      %v431 = vsel %vm369, %v358, 0
      %v434 = vsel %vm373, %v428, 0
      %v437 = vsel %vm373, %v429, 0
      %439 = vmatprep.subr.bf16.mxu0 %v437
      %440 = vmatpush1.bf16.msra.mxu0 %v434
      %441 = vmatprep.subr.bf16.mxu0 0
      %442 = vmatpush1.bf16.msra.mxu0 0
      %443 = vmatprep.subr.bf16.mxu0 0
      %444 = vmatpush1.bf16.msra.mxu0 0
      %445 = vmatprep.subr.bf16.mxu0 0
      %446 = vmatpush1.bf16.msra.mxu0 0
      %447 = vmatprep.subr.bf16.mxu0 0
      %448 = vmatpush1.bf16.msra.mxu0 0
      %449 = vmatprep.subr.bf16.mxu0 0
      %450 = vmatpush1.bf16.msra.mxu0 0
      %451 = vmatprep.subr.bf16.mxu0 0
      %452 = vmatpush1.bf16.msra.mxu0 0
      %453 = vmatprep.subr.bf16.mxu0 0
      %454 = vmatpush1.bf16.msra.mxu0 0
      %455 = vmatprep.subr.bf16.mxu0 0
      %456 = vmatpush1.bf16.msra.mxu0 0
      %457 = vmatprep.subr.bf16.mxu0 0
      %458 = vmatpush1.bf16.msra.mxu0 0
      %459 = vmatprep.subr.bf16.mxu0 0
      %460 = vmatpush1.bf16.msra.mxu0 0
      %461 = vmatprep.subr.bf16.mxu0 0
      %462 = vmatpush1.bf16.msra.mxu0 0
      %463 = vmatprep.subr.bf16.mxu0 0
      %464 = vmatpush1.bf16.msra.mxu0 0
      %465 = vmatprep.subr.bf16.mxu0 0
      %466 = vmatpush1.bf16.msra.mxu0 0
      %467 = vmatprep.subr.bf16.mxu0 0
      %468 = vmatpush1.bf16.msra.mxu0 0
      %469 = vmatprep.subr.bf16.mxu0 0
      %470 = vmatpush1.bf16.msra.mxu0 0
      %471 = vmatprep.mubr.bf16.mxu0 0
      %472 = vmatmul.mubr.bf16.gmra.mrb[0].mxu0 %v431
      %v473 = vpop.f32.mrb[0].mxu0
      %v474 = vadd.f32 %v415, %v473
      %v475 = vpop.f32.mrb[0].mxu0
      %v476 = vadd.f32 %v417, %v475
      %v477 = vpop.f32.mrb[0].mxu0
      %v478 = vpop.f32.mrb[0].mxu0
      %479 = vdwg.mxu0
      %v480 = vld [vmem:[%s4] sm:$0xff]
      %482 = vset.pattern.permute.xlu0 0
      %483 = vperm.xlu0 %482, %v480
      %v484 = vpop.permute.xlu0 %483
      %v486 = vadd.f32 %v474, %v484
      %v487 = vadd.f32 %v476, %v484
      %v488 = vmax.f32 %v486, 0.0
      %v489 = vmax.f32 %v487, 0.0
      %s490 = sld [smem:[#allocation2]]
      %v491 = vld [vmem:[%s5] sm:$0xff]
      %493 = vset.pattern.permute.xlu0 0
      %494 = vperm.xlu0 %493, %v491
      %v495 = vpop.permute.xlu0 %494
      %v497 = vmul.f32 %v488, %v495
      %v498 = vmul.f32 %v489, %v495
      %v499 = vrot.slane %v497, 4
      %v500 = vadd.f32 %v497, %v499
      %v501 = vrot.slane %v500, 2
      %v502 = vadd.f32 %v500, %v501
      %v503 = vrot.slane %v502, 1
      %v504 = vadd.f32 %v502, %v503
      %v505 = vrot.slane %v498, 4
      %v506 = vadd.f32 %v498, %v505
      %v507 = vrot.slane %v506, 2
      %v508 = vadd.f32 %v506, %v507
      %v509 = vrot.slane %v508, 1
      %v510 = vadd.f32 %v508, %v509
      %v511 = vstv %s490
      %v512 = vadd.f32 %v504, %v511
      %v513 = vadd.f32 %v510, %v511
      %v514 = vxor.u32 %v512, 2147483648
      %v515 = vxor.u32 %v513, 2147483648
      %v516 = vmul.f32 %v514, 1.442695
      %v517 = vpow.pop %v516
      %v518 = vmul.f32 %v515, 1.442695
      %v519 = vpow.pop %v518
      %v520 = vadd.f32 %v517, 1.0
      %v521 = vadd.f32 %v519, 1.0
      %v522 = vrcp.pop %v520
      %v523 = vmul.f32 1.0, %v522
      %v524 = vrcp.pop %v521
      %v525 = vmul.f32 1.0, %v524
      %v526 = vpack.c.bf16 %v523, %v523
      %v527 = vpack.c.bf16 %v525, %v525
      %v530 = vcombine.low %v526, %v527
      %v532 = vunpack.c.l.s4 1983009808
      %v533 = vunpack.c.0.s8 %v532
      %v534 = vlaneseq
      %v535 = vshrl.u32 %v534, 7
      %v536 = vsub.s32 %v533, %v535
      %v537 = vrot.slane %v530, %v536
      %v539 = vmul.bf16 %v357, %v537
      %540 = vst [vmem:[%s353] sm:$0xf] %v539
      %s541 = smul.u32 2, %s24
      %p542 = scmp.lt.s32.totalorder %s23, 1
      %s543 = scalar_select %p542, %s23, 1
      %p544 = scmp.lt.s32.totalorder %s541, 1
      %s545 = scalar_select %p544, %s541, 1
      %s546 = smul.addr %s543, 2
      %s547 = sadd.s32 %s545, %s546
      %s548 = smul.addr %s547, 2
      %s549 = scalar_lea.vmem %s7, %s548
      // Predicated region
      $region49: #{attention_gate.1} parent=47 // pred_check
        %p550 = pneg %p212
      $region50: #{attention_gate.1} parent=47 // pred_check_branch
        %552 = sbr.rel (%p550) target = $region52
      $region51: #{attention_gate.1} parent=47 // pred_region
        %s553 = smul.u32 2, %s24
      $region52: #{attention_gate.1} parent=47 // pred_fallthru
        _
    $region48: #{attention_gate.1} parent=5 // pred_fallthru
      _
    %p554 = scmp.le.s32.totalorder 2, %s14
    // Predicated region
    $region53: #{attention_gate.1} parent=5 // pred_check
      %p555 = pneg %p554
    $region54: #{attention_gate.1} parent=5 // pred_check_branch
      %557 = sbr.rel (%p555) target = $region56
    $region55: #{attention_gate.1} parent=5 // pred_region
      %s558 = ssub.s32 %s14, 2
      // Predicated region
      $region57: #{attention_gate.1} parent=55 // pred_check
        %p559 = pneg %p218
      $region58: #{attention_gate.1} parent=55 // pred_check_branch
        %561 = sbr.rel (%p559) target = $region60
      $region59: #{attention_gate.1} parent=55 // pred_region
        %s562 = smul.u32 2, %s26
        %p563 = scmp.lt.s32.totalorder %s25, 1
        %s564 = scalar_select %p563, %s25, 1
        %p565 = scmp.lt.s32.totalorder %s562, 1
        %s566 = scalar_select %p565, %s562, 1
        %s567 = smul.addr %s564, 2
        %s568 = sadd.s32 %s566, %s567
        %s569 = smul.addr %s568, 2
        %s570 = scalar_lea.vmem %s7, %s569
      $region60: #{attention_gate.1} parent=55 // pred_fallthru
        _
    $region56: #{attention_gate.1} parent=5 // pred_fallthru
      _
  $region6: #{attention_gate.1} parent=0 // loop_footer
    %s18 = sadd.s32 1, %s14
  $region7: #{attention_gate.1} parent=0 // loop_footer_branch
    %13 = sbr.rel target = $region3
  $region8: #{attention_gate.1} parent=0 // loop_exit
    _

</llo_original>
